<compile_context>
chip_gen: v6e
topology: v6e:2x2x1
jax: 0.10.0
libtpu: 0.0.40
codegen_flags: <defaults>
</compile_context>

<pallas_src>
import functools

import jax
import jax.numpy as jnp
from jax import lax
from jax.experimental import pallas as pl
from jax.experimental.pallas import tpu as pltpu


def _self_attention_kernel(x_ref, w_ref, o_ref, k_scr, v_scr,
                           *, c_out, c_out_p, tq, tkv):
    # x_ref : (1, C_in, N)        full point set for the current batch
    # w_ref : (3*c_out_p, C_in)   rows [0:P)=Wq/temp, [P:2P)=Wk, [2P:3P)=Wv
    # o_ref : (1, C_out, TQ)      current query tile of the output
    # k_scr : (c_out_p, N)        per-batch K projection (MXU dtype), persistent
    # v_scr : (c_out_p, N)        per-batch V projection (MXU dtype), persistent
    qi = pl.program_id(1)
    n = k_scr.shape[-1]
    num_kv = n // tkv
    mxu_dt = k_scr.dtype
    w = w_ref[...]

    # K/V projection once per batch; reused for all query tiles of this batch.
    @pl.when(qi == 0)
    def _():
        x = x_ref[0]                                                  # (C_in, N)
        k = jnp.dot(w[c_out_p:2 * c_out_p], x,
                    preferred_element_type=jnp.float32)               # (P, N)
        v = jnp.dot(w[2 * c_out_p:], x,
                    preferred_element_type=jnp.float32)               # (P, N)
        k_scr[...] = k.astype(mxu_dt)
        v_scr[...] = v.astype(mxu_dt)

    # Query projection for this tile (1/temperature already folded into Wq).
    q_start = pl.multiple_of(qi * tq, tq)
    x_q = x_ref[0, :, pl.ds(q_start, tq)]                             # (C_in, TQ)
    q = jnp.dot(w[0:c_out_p], x_q,
                preferred_element_type=jnp.float32).astype(mxu_dt)    # (P, TQ)

    # Online softmax over KV chunks; running stats kept in f32.
    def body(c, carry):
        m, denom, acc = carry
        k_start = pl.multiple_of(c * tkv, tkv)
        k_c = k_scr[:, pl.ds(k_start, tkv)]                           # (P, TKV)
        v_c = v_scr[:, pl.ds(k_start, tkv)]                           # (P, TKV)
        # s[j, i] = sum_c k[c, j] * q[c, i]  -> (TKV, TQ); channel contraction
        # expressed directly (no materialized transpose), keys on sublanes,
        # queries on lanes, so the softmax stats come out as (1, TQ) vectors.
        s = lax.dot_general(k_c, q, (((0,), (0,)), ((), ())),
                            preferred_element_type=jnp.float32)       # (TKV, TQ)
        m_new = jnp.maximum(m, jnp.max(s, axis=0, keepdims=True))     # (1, TQ)
        alpha = jnp.exp(m - m_new)                                    # (1, TQ)
        if mxu_dt == jnp.bfloat16:
            # bf16 EUP exp on v6e/v7x; denominator accumulated in f32.
            p = jnp.exp((s - m_new).astype(jnp.bfloat16))
            psum = jnp.sum(p, axis=0, keepdims=True, dtype=jnp.float32)
        else:
            p = jnp.exp(s - m_new)
            psum = jnp.sum(p, axis=0, keepdims=True)
        denom = alpha * denom + psum
        acc = alpha * acc + jnp.dot(v_c, p.astype(mxu_dt),
                                    preferred_element_type=jnp.float32)
        return m_new, denom, acc

    m0 = jnp.full((1, tq), -jnp.inf, dtype=jnp.float32)
    d0 = jnp.zeros((1, tq), dtype=jnp.float32)
    a0 = jnp.zeros((c_out_p, tq), dtype=jnp.float32)
    m, denom, acc = lax.fori_loop(0, num_kv, body, (m0, d0, a0),
                                  unroll=num_kv <= 4)

    # TODO(synk): nn.Dropout(attn_dropout) is identity in eval mode; the
    # training-time stochastic dropout of the attention matrix is not
    # reproduced here.

    # Deferred normalization on the small (C_out, TQ) output; exact reciprocal
    # for f32, EUP approximate reciprocal for low-precision inputs.
    y = acc * pl.reciprocal(denom, approx=mxu_dt != jnp.float32)
    o_ref[0] = y[0:c_out].astype(o_ref.dtype)


def _pick_tile(n, candidates):
    for c in candidates:
        if n >= c and n % c == 0:
            return c
    return n


def self_attention(x_bcn, wq, wk, wv, *, q_block_size=None, kv_block_size=None):
    """x_bcn: (B, C_in, N) exactly like the PyTorch module.
    wq/wk/wv: (C_out, C_in) Conv1d weights with the size-1 kernel dim squeezed.
    Returns (B, C_out, N)."""
    B, C_in, N = x_bcn.shape
    C_out = wq.shape[0]
    dt = x_bcn.dtype
    inv_temp = 1.0 / (float(C_out) ** 0.5)

    # Pad the projection row count up to the sublane tile so in-kernel row
    # slices of the fused weight / K / V scratch are free (aligned) views.
    sublane = 8 * (4 // jnp.dtype(dt).itemsize)
    c_out_p = ((C_out + sublane - 1) // sublane) * sublane

    def _pad_rows(w):
        if c_out_p == C_out:
            return w
        return jnp.pad(w, ((0, c_out_p - C_out), (0, 0)))

    # Fuse the three projections into one weight; fold 1/temperature into Wq.
    w_fused = jnp.concatenate(
        [_pad_rows(wq * inv_temp), _pad_rows(wk), _pad_rows(wv)], axis=0
    ).astype(dt)

    # Generation-aware tile / VMEM budget (v5e/v6e: 128 MiB, v7x: 64 MiB).
    try:
        vmem_cap = int(pltpu.get_tpu_info().vmem_capacity_bytes)
    except Exception:
        vmem_cap = 64 * 1024 * 1024
    big_vmem = vmem_cap >= 100 * 1024 * 1024
    tq = q_block_size or _pick_tile(
        N, (1024, 512, 256, 128) if big_vmem else (512, 256, 128))
    tkv = kv_block_size or _pick_tile(N, (512, 256, 128))
    if N % tq != 0 or N % tkv != 0:
        raise ValueError(
            f"num_points={N} must be divisible by query block {tq} and kv block {tkv}")
    vmem_limit = int(min(100 * 1024 * 1024, 0.75 * vmem_cap))

    kernel = functools.partial(
        _self_attention_kernel, c_out=C_out, c_out_p=c_out_p, tq=tq, tkv=tkv)

    return pl.pallas_call(
        kernel,
        out_shape=jax.ShapeDtypeStruct((B, C_out, N), dt),
        grid_spec=pltpu.PrefetchScalarGridSpec(
            num_scalar_prefetch=0,
            grid=(B, N // tq),
            in_specs=[
                # Full point set (source of Q, K and V): fetched once per batch
                # (block index only depends on b).
                pl.BlockSpec((1, C_in, N), lambda b, qi: (b, 0, 0)),
                # Fused projection weight, resident for the whole grid.
                pl.BlockSpec((3 * c_out_p, C_in), lambda b, qi: (0, 0)),
            ],
            out_specs=pl.BlockSpec((1, C_out, tq), lambda b, qi: (b, 0, qi)),
            scratch_shapes=[
                pltpu.VMEM((c_out_p, N), dt),   # K projection (per batch)
                pltpu.VMEM((c_out_p, N), dt),   # V projection (per batch)
            ],
        ),
        compiler_params=pltpu.CompilerParams(
            # qi must be "arbitrary" so the per-batch K/V scratch is valid;
            # B stays "parallel" for megacore sharding on v7x.
            dimension_semantics=("parallel", "arbitrary"),
            vmem_limit_bytes=vmem_limit,
        ),
    )(x_bcn, w_fused)


def _reference(x_bcn, wq, wk, wv):
    # Pure-JAX reference mirroring the PyTorch forward (dropout in eval mode).
    C_out = wq.shape[0]
    temperature = float(C_out) ** 0.5
    hp = jax.lax.Precision.HIGHEST
    q = jnp.einsum("oc,bcn->bon", wq, x_bcn, precision=hp)
    k = jnp.einsum("oc,bcn->bon", wk, x_bcn, precision=hp)
    v = jnp.einsum("oc,bcn->bon", wv, x_bcn, precision=hp)
    attn = jnp.einsum("bon,bom->bnm", q / temperature, k, precision=hp)
    attn = jax.nn.softmax(attn, axis=-1)
    y = jnp.einsum("bnm,bom->bno", attn, v, precision=hp)
    return jnp.transpose(y, (0, 2, 1))


if __name__ == "__main__":
    B, C_in, N = 2, 8, 128
    C_out = C_in  # out_channel defaults to in_channel in the module

    key = jax.random.PRNGKey(0)
    kx, kq, kk, kv = jax.random.split(key, 4)

    x = jax.random.normal(kx, (B, C_in, N), dtype=jnp.float32)
    # Conv1d weight shape (out, in, 1) with the kernel dim squeezed.
    scale = 1.0 / (C_in ** 0.5)
    wq = jax.random.uniform(kq, (C_out, C_in), jnp.float32, -scale, scale)
    wk = jax.random.uniform(kk, (C_out, C_in), jnp.float32, -scale, scale)
    wv = jax.random.uniform(kv, (C_out, C_in), jnp.float32, -scale, scale)

    y = self_attention(x, wq, wk, wv)
    y = jax.block_until_ready(y)

    y_ref = _reference(x, wq, wk, wv)
    assert y.shape == (B, C_out, N)
    # Tolerance covers MXU pass-count differences between the kernel's f32
    # matmuls and XLA's einsum on the same data.
    assert jnp.allclose(y, y_ref, atol=2e-3, rtol=2e-3), "mismatch vs reference"

    print("KERNEL_OK")
</pallas_src>

<mosaic_0001>
module attributes {stable_mosaic.version = 11 : i64} {
  func.func @_self_attention_kernel(%arg0: i32, %arg1: i32, %arg2: memref<1x8x128xf32, #tpu.memory_space<vmem>>, %arg3: memref<24x8xf32, #tpu.memory_space<vmem>>, %arg4: memref<1x8x128xf32, #tpu.memory_space<vmem>>, %arg5: memref<8x128xf32, #tpu.memory_space<vmem>>, %arg6: memref<8x128xf32, #tpu.memory_space<vmem>>) attributes {dimension_semantics = [#tpu.dimension_semantics<parallel>, #tpu.dimension_semantics<arbitrary>], iteration_bounds = array<i64: 2, 1>, scalar_prefetch = 0 : i64, scratch_operands = 2 : i64, tpu.core_type = #tpu.core_type<tc>, window_params = [{transform_indices = @transform_0, window_bounds = array<i64: 1, 8, 128>}, {pipeline_mode = #tpu.pipeline_mode<synchronous>, transform_indices = @transform_1, window_bounds = array<i64: 24, 8>}, {transform_indices = @transform_2, window_bounds = array<i64: 1, 8, 128>}]} {
    %c0 = arith.constant 0 : index
    %c0_0 = arith.constant 0 : index
    %0 = vector.load %arg3[%c0, %c0_0] : memref<24x8xf32, #tpu.memory_space<vmem>>, vector<24x8xf32>
    %c0_i32 = arith.constant 0 : i32
    %1 = arith.cmpi eq, %arg1, %c0_i32 : i32
    %2 = arith.extui %1 : i1 to i32
    %c0_i32_1 = arith.constant 0 : i32
    %3 = arith.cmpi ne, %2, %c0_i32_1 : i32
    scf.if %3 {
      %c0_18 = arith.constant 0 : index
      %c0_19 = arith.constant 0 : index
      %c0_20 = arith.constant 0 : index
      %43 = vector.load %arg2[%c0_18, %c0_19, %c0_20] : memref<1x8x128xf32, #tpu.memory_space<vmem>>, vector<1x8x128xf32>
      %44 = vector.shape_cast %43 : vector<1x8x128xf32> to vector<8x128xf32>
      %45 = vector.extract_strided_slice %0 {offsets = [8, 0], sizes = [8, 8], strides = [1, 1]} : vector<24x8xf32> to vector<8x8xf32>
      %cst_21 = arith.constant dense<0.000000e+00> : vector<8x128xf32>
      %46 = tpu.matmul %45, %44, %cst_21 {dimension_numbers = #tpu.dot_dimension_numbers<[1], [0], [0], [1], [0, 0, 1, 1], [], []>} : vector<8x8xf32>, vector<8x128xf32>, vector<8x128xf32> -> vector<8x128xf32>
      %47 = vector.extract_strided_slice %0 {offsets = [16, 0], sizes = [8, 8], strides = [1, 1]} : vector<24x8xf32> to vector<8x8xf32>
      %cst_22 = arith.constant dense<0.000000e+00> : vector<8x128xf32>
      %48 = tpu.matmul %47, %44, %cst_22 {dimension_numbers = #tpu.dot_dimension_numbers<[1], [0], [0], [1], [0, 0, 1, 1], [], []>} : vector<8x8xf32>, vector<8x128xf32>, vector<8x128xf32> -> vector<8x128xf32>
      %c0_23 = arith.constant 0 : index
      %c0_24 = arith.constant 0 : index
      %49 = vector.load %arg5[%c0_23, %c0_24] : memref<8x128xf32, #tpu.memory_space<vmem>>, vector<8x128xf32>
      tpu.vector_store %arg5[%c0_23, %c0_24], %46 {strides = array<i32>} : memref<8x128xf32, #tpu.memory_space<vmem>>, vector<8x128xf32>,
      %c0_25 = arith.constant 0 : index
      %c0_26 = arith.constant 0 : index
      %50 = vector.load %arg6[%c0_25, %c0_26] : memref<8x128xf32, #tpu.memory_space<vmem>>, vector<8x128xf32>
      tpu.vector_store %arg6[%c0_25, %c0_26], %48 {strides = array<i32>} : memref<8x128xf32, #tpu.memory_space<vmem>>, vector<8x128xf32>,
    } else {
    }
    %c128_i32 = arith.constant 128 : i32
    %4 = arith.muli %arg1, %c128_i32 : i32
    %5 = tpu.assume_multiple %4, 128 : i32
    %c0_2 = arith.constant 0 : index
    %c0_3 = arith.constant 0 : index
    %6 = arith.index_cast %5 : i32 to index
    %7 = vector.load %arg2[%c0_2, %c0_3, %6] : memref<1x8x128xf32, #tpu.memory_space<vmem>>, vector<1x8x128xf32>
    %8 = vector.shape_cast %7 : vector<1x8x128xf32> to vector<8x128xf32>
    %9 = vector.extract_strided_slice %0 {offsets = [0, 0], sizes = [8, 8], strides = [1, 1]} : vector<24x8xf32> to vector<8x8xf32>
    %cst = arith.constant dense<0.000000e+00> : vector<8x128xf32>
    %10 = tpu.matmul %9, %8, %cst {dimension_numbers = #tpu.dot_dimension_numbers<[1], [0], [0], [1], [0, 0, 1, 1], [], []>} : vector<8x8xf32>, vector<8x128xf32>, vector<8x128xf32> -> vector<8x128xf32>
    %cst_4 = arith.constant 0xFF800000 : f32
    %11 = vector.broadcast %cst_4 : f32 to vector<1x128xf32>
    %cst_5 = arith.constant 0.000000e+00 : f32
    %12 = vector.broadcast %cst_5 : f32 to vector<1x128xf32>
    %cst_6 = arith.constant 0.000000e+00 : f32
    %13 = vector.broadcast %cst_6 : f32 to vector<8x128xf32>
    %c0_i32_7 = arith.constant 0 : i32
    %c128_i32_8 = arith.constant 128 : i32
    %14 = arith.muli %c0_i32_7, %c128_i32_8 : i32
    %15 = tpu.assume_multiple %14, 128 : i32
    %c0_9 = arith.constant 0 : index
    %16 = arith.index_cast %15 : i32 to index
    %17 = vector.load %arg5[%c0_9, %16] : memref<8x128xf32, #tpu.memory_space<vmem>>, vector<8x128xf32>
    %c0_10 = arith.constant 0 : index
    %18 = arith.index_cast %15 : i32 to index
    %19 = vector.load %arg6[%c0_10, %18] : memref<8x128xf32, #tpu.memory_space<vmem>>, vector<8x128xf32>
    %cst_11 = arith.constant dense<0.000000e+00> : vector<128x128xf32>
    %20 = tpu.matmul %17, %10, %cst_11 {dimension_numbers = #tpu.dot_dimension_numbers<[0], [0], [1], [1], [0, 1, 1, 1], [], []>} : vector<8x128xf32>, vector<8x128xf32>, vector<128x128xf32> -> vector<128x128xf32>
    %cst_12 = arith.constant dense<0xFF800000> : vector<128xf32>
    %21 = vector.multi_reduction <maximumf>, %20, %cst_12 [0] : vector<128x128xf32> to vector<128xf32>
    %22 = vector.shape_cast %21 : vector<128xf32> to vector<1x128xf32>
    %23 = arith.maximumf %11, %22 : vector<1x128xf32>
    %24 = arith.subf %11, %23 : vector<1x128xf32>
    %25 = math.exp %24 : vector<1x128xf32>
    %26 = vector.broadcast %23 : vector<1x128xf32> to vector<128x128xf32>
    %27 = arith.subf %20, %26 : vector<128x128xf32>
    %28 = math.exp %27 : vector<128x128xf32>
    %cst_13 = arith.constant dense<0.000000e+00> : vector<128xf32>
    %29 = vector.multi_reduction <add>, %28, %cst_13 [0] : vector<128x128xf32> to vector<128xf32>
    %30 = vector.shape_cast %29 : vector<128xf32> to vector<1x128xf32>
    %31 = arith.mulf %25, %12 : vector<1x128xf32>
    %32 = arith.addf %31, %30 : vector<1x128xf32>
    %33 = vector.broadcast %25 : vector<1x128xf32> to vector<8x128xf32>
    %34 = arith.mulf %33, %13 : vector<8x128xf32>
    %cst_14 = arith.constant dense<0.000000e+00> : vector<8x128xf32>
    %35 = tpu.matmul %19, %28, %cst_14 {dimension_numbers = #tpu.dot_dimension_numbers<[1], [0], [0], [1], [0, 0, 1, 1], [], []>} : vector<8x128xf32>, vector<128x128xf32>, vector<8x128xf32> -> vector<8x128xf32>
    %36 = arith.addf %34, %35 : vector<8x128xf32>
    %c1_i32 = arith.constant 1 : i32
    %37 = tpu.reciprocal %32 : vector<1x128xf32> -> vector<1x128xf32>
    %38 = vector.broadcast %37 : vector<1x128xf32> to vector<8x128xf32>
    %39 = arith.mulf %36, %38 : vector<8x128xf32>
    %c0_15 = arith.constant 0 : index
    %c0_16 = arith.constant 0 : index
    %c0_17 = arith.constant 0 : index
    %40 = vector.load %arg4[%c0_15, %c0_16, %c0_17] : memref<1x8x128xf32, #tpu.memory_space<vmem>>, vector<1x8x128xf32>
    %41 = vector.shape_cast %40 : vector<1x8x128xf32> to vector<8x128xf32>
    %42 = vector.shape_cast %39 : vector<8x128xf32> to vector<1x8x128xf32>
    tpu.vector_store %arg4[%c0_15, %c0_16, %c0_17], %42 {strides = array<i32>} : memref<1x8x128xf32, #tpu.memory_space<vmem>>, vector<1x8x128xf32>,
    return
  }
  func.func @transform_0(%arg0: i32, %arg1: i32) -> (i32, i32, i32) {
    %c0_i32 = arith.constant 0 : i32
    %c0_i32_0 = arith.constant 0 : i32
    %c0_i32_1 = arith.constant 0 : i32
    return %arg0, %c0_i32, %c0_i32_0 : i32, i32, i32
  }
  func.func @transform_1(%arg0: i32, %arg1: i32) -> (i32, i32) {
    %c0_i32 = arith.constant 0 : i32
    %c0_i32_0 = arith.constant 0 : i32
    %c0_i32_1 = arith.constant 0 : i32
    return %c0_i32, %c0_i32_0 : i32, i32
  }
  func.func @transform_2(%arg0: i32, %arg1: i32) -> (i32, i32, i32) {
    %c0_i32 = arith.constant 0 : i32
    %c0_i32_0 = arith.constant 0 : i32
    return %arg0, %c0_i32, %arg1 : i32, i32, i32
  }
}

</mosaic_0001>

<llo_original>
// kernel: tpu_custom_call.1
$region0: #{tpu_custom_call.1}
  #allocation0 [shape = 'u32[]', space=smem, size = 0x4, offset = 0x4, fixed_abs, tag = 'smem constant byte address 0x4 - core index']
  #allocation1 [shape = 'u32[144,128]{1,0:T(1,128)}', space=vmem, size = 0x12000, scoped, tag = 'internal scratch']
  #allocation2 [shape = 'f32[8,128]{1,0:T(8,128)}', space=vmem, size = 0x1000, scoped, tag = 'scratch operand']
  #allocation3 [shape = 'f32[8,128]{1,0:T(8,128)}', space=vmem, size = 0x1000, scoped, tag = 'scratch operand']
  %s0 = inlined_call_operand.vmem [shape: f32[2,8,128], index: 0, kind: input, shape index: {}]
  %s1 = inlined_call_operand.vmem [shape: f32[24,8], index: 1, kind: input, shape index: {}]
  %s2 = inlined_call_operand.hbm [shape: f32[2,8,128], index: 2, kind: output, shape index: {}]
  %s3 = sld [smem:[#allocation0]]
  $region45: #{tpu_custom_call.1} parent=0
    _
  %s5 = ssub.s32 1, %s3
  %s6 = scalar_select 0, %s5, %s3
  $region1: #{tpu_custom_call.1} parent=0
    #allocation4 [shape = 'u8[8192]{0}', space=vmem, size = 0x2000, scoped, tag = 'output window, operand 0']
    #allocation5 [shape = 's32[2]{0}', space=sflag, size = 0x8, scoped, tag = 'scoped memory for tpu_custom_call.1']
    %7 = vsyncpa [#allocation5], 0
    %s8 = scalar_lea.sflag [#allocation5], 1
    %9 = vsyncpa %s8, 0
    loop: start=0, step=1, limit=4
    $region2: #{tpu_custom_call.1} parent=1 // loop_pre_header
      _
    $region3: #{tpu_custom_call.1} parent=1 // loop_header
      %s11 = sphi 0, %s15
      %p12 = scmp.ge.s32.totalorder %s11, 4
      %s18 = sphi 0, %s30
      %s19 = sphi 0, %s26
      %s20 = sphi 0, %s18
      %s21 = sphi 0, %s19
      %s22 = sphi 0, %s20
      %s23 = sphi 0, %s21
      %s33 = sphi 0, %s35
      %s36 = sphi 0, %s33
      %s37 = sphi 0, %s36
      %s53 = sphi 0, %s37
      %s57 = sphi 0, %s57
      %s59 = sphi 0, %s57
      %s60 = sphi 0, %s59
      %s74 = sphi 0, %s60
      %s82 = sphi 0, %s84
      %s85 = sphi 0, %s82
      %s86 = sphi 0, %s85
      %s102 = sphi 0, %s86
    $region4: #{tpu_custom_call.1} parent=1 // loop_header_branch
      %14 = sbr.rel (%p12) target = $region8
    $region5: #{tpu_custom_call.1} parent=1 // loop_body
      %s16 = ssub.s32 %s11, 1
      %s17 = ssub.s32 %s11, 2
      %s24 = sadd.s32 1, %s19
      %p25 = scmp.ge.s32.totalorder %s24, 1
      %s26 = scalar_select %p25, 0, %s24
      %s27 = sadd.s32 1, %s18
      %s28 = scalar_select %p25, %s27, %s18
      %p29 = scmp.ge.s32.totalorder %s28, 2
      %s30 = scalar_select %p29, 0, %s28
      %s31 = ssub.s32 %s18, %s30
      %p32 = scmp.eq.s32.totalorder %s31, 0
      %s34 = sadd.s32 %s33, 1
      %s35 = scalar_select %p32, %s33, %s34
      %p38 = pneg %p32
      %p39 = scmp.eq.s32.totalorder %s11, 1
      %p40 = por %p38, %p39
      %p41 = scmp.ne.s32.totalorder %s33, %s36
      %p42 = scmp.eq.s32.totalorder %s11, 0
      %p43 = por %p41, %p42
      %p44 = scmp.ne.s32.totalorder %s33, %s36
      %p45 = scmp.eq.s32.totalorder %s16, 1
      %p46 = por %p44, %p45
      %p47 = scmp.ne.s32.totalorder %s36, %s37
      %p48 = scmp.eq.s32.totalorder %s16, 0
      %p49 = por %p47, %p48
      %p50 = scmp.ne.s32.totalorder %s36, %s37
      %p51 = scmp.eq.s32.totalorder %s17, 1
      %p52 = por %p50, %p51
      %p54 = scmp.ne.s32.totalorder %s37, %s53
      %p55 = scmp.eq.s32.totalorder %s17, 0
      %p56 = por %p54, %p55
      %s58 = sadd.s32 %s57, 1
      %p61 = scmp.eq.s32.totalorder %s11, 1
      %p62 = scmp.ne.s32.totalorder %s57, %s59
      %p63 = scmp.eq.s32.totalorder %s11, 0
      %p64 = por %p62, %p63
      %p65 = scmp.ne.s32.totalorder %s57, %s59
      %p66 = scmp.eq.s32.totalorder %s16, 1
      %p67 = por %p65, %p66
      %p68 = scmp.ne.s32.totalorder %s59, %s60
      %p69 = scmp.eq.s32.totalorder %s16, 0
      %p70 = por %p68, %p69
      %p71 = scmp.ne.s32.totalorder %s59, %s60
      %p72 = scmp.eq.s32.totalorder %s17, 1
      %p73 = por %p71, %p72
      %p75 = scmp.ne.s32.totalorder %s60, %s74
      %p76 = scmp.eq.s32.totalorder %s17, 0
      %p77 = por %p75, %p76
      %s78 = ssub.s32 %s18, %s30
      %s79 = ssub.s32 %s19, %s26
      %s80 = sor.u32 %s78, %s79
      %p81 = scmp.eq.s32.totalorder %s80, 0
      %s83 = sadd.s32 %s82, 1
      %s84 = scalar_select %p81, %s82, %s83
      %p87 = pneg %p81
      %p88 = scmp.eq.s32.totalorder %s11, 1
      %p89 = por %p87, %p88
      %p90 = scmp.ne.s32.totalorder %s82, %s85
      %p91 = scmp.eq.s32.totalorder %s11, 0
      %p92 = por %p90, %p91
      %p93 = scmp.ne.s32.totalorder %s82, %s85
      %p94 = scmp.eq.s32.totalorder %s16, 1
      %p95 = por %p93, %p94
      %p96 = scmp.ne.s32.totalorder %s85, %s86
      %p97 = scmp.eq.s32.totalorder %s16, 0
      %p98 = por %p96, %p97
      %p99 = scmp.ne.s32.totalorder %s85, %s86
      %p100 = scmp.eq.s32.totalorder %s17, 1
      %p101 = por %p99, %p100
      %p103 = scmp.ne.s32.totalorder %s86, %s102
      %p104 = scmp.eq.s32.totalorder %s17, 0
      %p105 = por %p103, %p104
      %p106 = scmp.le.s32.totalorder 1, %s11
      %p107 = scmp.lt.s32.totalorder %s11, 3
      %p108 = pnand %p106, %p107
      %p109 = pneg %p108
      // Predicated region
      $region9: #{tpu_custom_call.1} parent=5 // pred_check
        _
      $region10: #{tpu_custom_call.1} parent=5 // pred_check_branch
        %111 = sbr.rel (%p108) target = $region12
      $region11: #{tpu_custom_call.1} parent=5 // pred_region
        %s112 = ssub.s32 %s11, 1
        // Predicated region
        $region13: #{tpu_custom_call.1} parent=11 // pred_check
          %p113 = pneg %p70
        $region14: #{tpu_custom_call.1} parent=11 // pred_check_branch
          %115 = sbr.rel (%p113) target = $region16
        $region15: #{tpu_custom_call.1} parent=11 // pred_region
          _
        $region16: #{tpu_custom_call.1} parent=11 // pred_fallthru
          _
      $region12: #{tpu_custom_call.1} parent=5 // pred_fallthru
        _
      %p116 = scmp.lt.s32.totalorder %s11, 2
      // Predicated region
      $region17: #{tpu_custom_call.1} parent=5 // pred_check
        %p117 = pneg %p116
      $region18: #{tpu_custom_call.1} parent=5 // pred_check_branch
        %119 = sbr.rel (%p117) target = $region20
      $region19: #{tpu_custom_call.1} parent=5 // pred_region
        // Predicated region
        $region21: #{tpu_custom_call.1} parent=19 // pred_check
          %p120 = pneg %p43
        $region22: #{tpu_custom_call.1} parent=19 // pred_check_branch
          %122 = sbr.rel (%p120) target = $region24
        $region23: #{tpu_custom_call.1} parent=19 // pred_region
          %p123 = scmp.lt.s32.totalorder %s18, 1
          %s124 = scalar_select %p123, %s18, 1
          %s125 = smul.addr %s124, 8
          %s126 = scalar_lea.vmem %s0, %s125
        $region24: #{tpu_custom_call.1} parent=19 // pred_fallthru
          _
      $region20: #{tpu_custom_call.1} parent=5 // pred_fallthru
        _
      %p127 = scmp.le.s32.totalorder 1, %s11
      %p128 = scmp.lt.s32.totalorder %s11, 3
      %p129 = pnand %p127, %p128
      %p130 = pneg %p129
      // Predicated region
      $region25: #{tpu_custom_call.1} parent=5 // pred_check
        _
      $region26: #{tpu_custom_call.1} parent=5 // pred_check_branch
        %132 = sbr.rel (%p129) target = $region28
      $region27: #{tpu_custom_call.1} parent=5 // pred_region
        %s133 = ssub.s32 %s11, 1
        %p134 = scmp.lt.s32.totalorder %s20, 1
        %s135 = scalar_select %p134, %s20, 1
        %s136 = smul.addr %s135, 8
        %s137 = scalar_lea.vmem %s0, %s136
        %p138 = pneg %p49
        %p139 = pneg %p46
        %p140 = pneg %p70
        %p141 = pneg %p67
        %p142 = pneg %p98
        %p143 = pneg %p95
        %s144 = sand.u32 %s85, 1
        %s145 = scalar_lea.sflag [#allocation5], %s144
        %s146 = sand.u32 %s85, 1
        %s147 = smul.addr %s146, 8
        %s148 = scalar_lea.vmem [#allocation4], %s147
        %p149 = scmp.lt.s32.totalorder %s20, 1
        %s150 = scalar_select %p149, %s20, 1
        %s151 = smul.addr %s150, 8
        %s152 = scalar_lea.vmem %s0, %s151
        %v153 = vld [vmem:[%s1] sm:$0xff]
        %v154 = vld [vmem:[%s1 + $0x8] sm:$0xff]
        %v155 = vld [vmem:[%s1 + $0x10] sm:$0xff]
        %p156 = scmp.eq.s32.totalorder %s21, 0
        // Predicated region
        $region29: #{tpu_custom_call.1} parent=27 // pred_check
          %p157 = pneg %p156
        $region30: #{tpu_custom_call.1} parent=27 // pred_check_branch
          %159 = sbr.rel (%p157) target = $region32
        $region31: #{tpu_custom_call.1} parent=27 // pred_region
          %v160 = vld [vmem:[%s152] sm:$0xff]
          %vm161 = vcmask 64512
          %v163 = vsel %vm161, %v154, 0
          %165 = vmatprep.subr.mxu0 0.0
          %166 = vmatpush1.msra.mxu0 0.0
          %167 = vmatprep.subr.mxu0 0.0
          %168 = vmatpush1.msra.mxu0 0.0
          %169 = vmatprep.subr.mxu0 0.0
          %170 = vmatpush1.msra.mxu0 0.0
          %171 = vmatprep.subr.mxu0 0.0
          %172 = vmatpush1.msra.mxu0 0.0
          %173 = vmatprep.subr.mxu0 0.0
          %174 = vmatpush1.msra.mxu0 0.0
          %175 = vmatprep.subr.mxu0 0.0
          %176 = vmatpush1.msra.mxu0 0.0
          %177 = vmatprep.subr.mxu0 0.0
          %178 = vmatpush1.msra.mxu0 0.0
          %179 = vmatprep.subr.mxu0 0.0
          %180 = vmatpush1.msra.mxu0 0.0
          %181 = vmatprep.subr.mxu0 0.0
          %182 = vmatpush1.msra.mxu0 0.0
          %183 = vmatprep.subr.mxu0 0.0
          %184 = vmatpush1.msra.mxu0 0.0
          %185 = vmatprep.subr.mxu0 0.0
          %186 = vmatpush1.msra.mxu0 0.0
          %187 = vmatprep.subr.mxu0 0.0
          %188 = vmatpush1.msra.mxu0 0.0
          %189 = vmatprep.subr.mxu0 0.0
          %190 = vmatpush1.msra.mxu0 0.0
          %191 = vmatprep.subr.mxu0 0.0
          %192 = vmatpush1.msra.mxu0 0.0
          %193 = vmatprep.subr.mxu0 0.0
          %194 = vmatpush1.msra.mxu0 0.0
          %195 = vmatprep.subr.mxu0 0.0
          %196 = vmatpush1.msra.mxu0 %v160
          %197 = vmatprep.subr.mxu0 0.0
          %198 = vmatpush2.msra.mxu0 0.0
          %199 = vmatprep.subr.mxu0 0.0
          %200 = vmatpush2.msra.mxu0 0.0
          %201 = vmatprep.subr.mxu0 0.0
          %202 = vmatpush2.msra.mxu0 0.0
          %203 = vmatprep.subr.mxu0 0.0
          %204 = vmatpush2.msra.mxu0 0.0
          %205 = vmatprep.subr.mxu0 0.0
          %206 = vmatpush2.msra.mxu0 0.0
          %207 = vmatprep.subr.mxu0 0.0
          %208 = vmatpush2.msra.mxu0 0.0
          %209 = vmatprep.subr.mxu0 0.0
          %210 = vmatpush2.msra.mxu0 0.0
          %211 = vmatprep.subr.mxu0 0.0
          %212 = vmatpush2.msra.mxu0 0.0
          %213 = vmatprep.subr.mxu0 0.0
          %214 = vmatpush2.msra.mxu0 0.0
          %215 = vmatprep.subr.mxu0 0.0
          %216 = vmatpush2.msra.mxu0 0.0
          %217 = vmatprep.subr.mxu0 0.0
          %218 = vmatpush2.msra.mxu0 0.0
          %219 = vmatprep.subr.mxu0 0.0
          %220 = vmatpush2.msra.mxu0 0.0
          %221 = vmatprep.subr.mxu0 0.0
          %222 = vmatpush2.msra.mxu0 0.0
          %223 = vmatprep.subr.mxu0 0.0
          %224 = vmatpush2.msra.mxu0 0.0
          %225 = vmatprep.subr.mxu0 0.0
          %226 = vmatpush2.msra.mxu0 0.0
          %227 = vmatprep.subr.mxu0 0.0
          %228 = vmatpush2.msra.mxu0 0.0
          %229 = vmatprep.mubr.f32.mxu0 0.0
          %230 = vmatmul.mubr.f32.gmra.mxu0 %v163
          %v231 = vpop.f32.mrf.mxu0
          %v232 = vadd.f32 0.0, %v231
          %v233 = vpop.f32.mrf.mxu0
          %234 = vdwg.mxu0
          %v236 = vsel %vm161, %v155, 0
          %238 = vmatprep.subr.mxu0 0.0
          %239 = vmatpush1.msra.mxu0 0.0
          %240 = vmatprep.subr.mxu0 0.0
          %241 = vmatpush1.msra.mxu0 0.0
          %242 = vmatprep.subr.mxu0 0.0
          %243 = vmatpush1.msra.mxu0 0.0
          %244 = vmatprep.subr.mxu0 0.0
          %245 = vmatpush1.msra.mxu0 0.0
          %246 = vmatprep.subr.mxu0 0.0
          %247 = vmatpush1.msra.mxu0 0.0
          %248 = vmatprep.subr.mxu0 0.0
          %249 = vmatpush1.msra.mxu0 0.0
          %250 = vmatprep.subr.mxu0 0.0
          %251 = vmatpush1.msra.mxu0 0.0
          %252 = vmatprep.subr.mxu0 0.0
          %253 = vmatpush1.msra.mxu0 0.0
          %254 = vmatprep.subr.mxu0 0.0
          %255 = vmatpush1.msra.mxu0 0.0
          %256 = vmatprep.subr.mxu0 0.0
          %257 = vmatpush1.msra.mxu0 0.0
          %258 = vmatprep.subr.mxu0 0.0
          %259 = vmatpush1.msra.mxu0 0.0
          %260 = vmatprep.subr.mxu0 0.0
          %261 = vmatpush1.msra.mxu0 0.0
          %262 = vmatprep.subr.mxu0 0.0
          %263 = vmatpush1.msra.mxu0 0.0
          %264 = vmatprep.subr.mxu0 0.0
          %265 = vmatpush1.msra.mxu0 0.0
          %266 = vmatprep.subr.mxu0 0.0
          %267 = vmatpush1.msra.mxu0 0.0
          %268 = vmatprep.subr.mxu0 0.0
          %269 = vmatpush1.msra.mxu0 %v160
          %270 = vmatprep.subr.mxu0 0.0
          %271 = vmatpush2.msra.mxu0 0.0
          %272 = vmatprep.subr.mxu0 0.0
          %273 = vmatpush2.msra.mxu0 0.0
          %274 = vmatprep.subr.mxu0 0.0
          %275 = vmatpush2.msra.mxu0 0.0
          %276 = vmatprep.subr.mxu0 0.0
          %277 = vmatpush2.msra.mxu0 0.0
          %278 = vmatprep.subr.mxu0 0.0
          %279 = vmatpush2.msra.mxu0 0.0
          %280 = vmatprep.subr.mxu0 0.0
          %281 = vmatpush2.msra.mxu0 0.0
          %282 = vmatprep.subr.mxu0 0.0
          %283 = vmatpush2.msra.mxu0 0.0
          %284 = vmatprep.subr.mxu0 0.0
          %285 = vmatpush2.msra.mxu0 0.0
          %286 = vmatprep.subr.mxu0 0.0
          %287 = vmatpush2.msra.mxu0 0.0
          %288 = vmatprep.subr.mxu0 0.0
          %289 = vmatpush2.msra.mxu0 0.0
          %290 = vmatprep.subr.mxu0 0.0
          %291 = vmatpush2.msra.mxu0 0.0
          %292 = vmatprep.subr.mxu0 0.0
          %293 = vmatpush2.msra.mxu0 0.0
          %294 = vmatprep.subr.mxu0 0.0
          %295 = vmatpush2.msra.mxu0 0.0
          %296 = vmatprep.subr.mxu0 0.0
          %297 = vmatpush2.msra.mxu0 0.0
          %298 = vmatprep.subr.mxu0 0.0
          %299 = vmatpush2.msra.mxu0 0.0
          %300 = vmatprep.subr.mxu0 0.0
          %301 = vmatpush2.msra.mxu0 0.0
          %302 = vmatprep.mubr.f32.mxu0 0.0
          %303 = vmatmul.mubr.f32.gmra.mxu0 %v236
          %v304 = vpop.f32.mrf.mxu0
          %v305 = vadd.f32 0.0, %v304
          %v306 = vpop.f32.mrf.mxu0
          %307 = vdwg.mxu0
          %308 = vst [vmem:[#allocation2] sm:$0xff] %v232
          %309 = vst [vmem:[#allocation3] sm:$0xff] %v305
        $region32: #{tpu_custom_call.1} parent=27 // pred_fallthru
          _
        %s310 = smul.u32 %s21, 128
        %s311 = sshra.s32 %s310, 7
        %s312 = sand.u32 %s310, 127
        %s313 = scalar_lea.vmem %s152, %s311
        %v314 = vld [vmem:[%s313] sm:$0xff]
        %vm315 = vcmask 64512
        %v317 = vsel %vm315, %v153, 0
        %319 = vmatprep.subr.mxu0 0.0
        %320 = vmatpush1.msra.mxu0 0.0
        %321 = vmatprep.subr.mxu0 0.0
        %322 = vmatpush1.msra.mxu0 0.0
        %323 = vmatprep.subr.mxu0 0.0
        %324 = vmatpush1.msra.mxu0 0.0
        %325 = vmatprep.subr.mxu0 0.0
        %326 = vmatpush1.msra.mxu0 0.0
        %327 = vmatprep.subr.mxu0 0.0
        %328 = vmatpush1.msra.mxu0 0.0
        %329 = vmatprep.subr.mxu0 0.0
        %330 = vmatpush1.msra.mxu0 0.0
        %331 = vmatprep.subr.mxu0 0.0
        %332 = vmatpush1.msra.mxu0 0.0
        %333 = vmatprep.subr.mxu0 0.0
        %334 = vmatpush1.msra.mxu0 0.0
        %335 = vmatprep.subr.mxu0 0.0
        %336 = vmatpush1.msra.mxu0 0.0
        %337 = vmatprep.subr.mxu0 0.0
        %338 = vmatpush1.msra.mxu0 0.0
        %339 = vmatprep.subr.mxu0 0.0
        %340 = vmatpush1.msra.mxu0 0.0
        %341 = vmatprep.subr.mxu0 0.0
        %342 = vmatpush1.msra.mxu0 0.0
        %343 = vmatprep.subr.mxu0 0.0
        %344 = vmatpush1.msra.mxu0 0.0
        %345 = vmatprep.subr.mxu0 0.0
        %346 = vmatpush1.msra.mxu0 0.0
        %347 = vmatprep.subr.mxu0 0.0
        %348 = vmatpush1.msra.mxu0 0.0
        %349 = vmatprep.subr.mxu0 0.0
        %350 = vmatpush1.msra.mxu0 %v314
        %351 = vmatprep.subr.mxu0 0.0
        %352 = vmatpush2.msra.mxu0 0.0
        %353 = vmatprep.subr.mxu0 0.0
        %354 = vmatpush2.msra.mxu0 0.0
        %355 = vmatprep.subr.mxu0 0.0
        %356 = vmatpush2.msra.mxu0 0.0
        %357 = vmatprep.subr.mxu0 0.0
        %358 = vmatpush2.msra.mxu0 0.0
        %359 = vmatprep.subr.mxu0 0.0
        %360 = vmatpush2.msra.mxu0 0.0
        %361 = vmatprep.subr.mxu0 0.0
        %362 = vmatpush2.msra.mxu0 0.0
        %363 = vmatprep.subr.mxu0 0.0
        %364 = vmatpush2.msra.mxu0 0.0
        %365 = vmatprep.subr.mxu0 0.0
        %366 = vmatpush2.msra.mxu0 0.0
        %367 = vmatprep.subr.mxu0 0.0
        %368 = vmatpush2.msra.mxu0 0.0
        %369 = vmatprep.subr.mxu0 0.0
        %370 = vmatpush2.msra.mxu0 0.0
        %371 = vmatprep.subr.mxu0 0.0
        %372 = vmatpush2.msra.mxu0 0.0
        %373 = vmatprep.subr.mxu0 0.0
        %374 = vmatpush2.msra.mxu0 0.0
        %375 = vmatprep.subr.mxu0 0.0
        %376 = vmatpush2.msra.mxu0 0.0
        %377 = vmatprep.subr.mxu0 0.0
        %378 = vmatpush2.msra.mxu0 0.0
        %379 = vmatprep.subr.mxu0 0.0
        %380 = vmatpush2.msra.mxu0 0.0
        %381 = vmatprep.subr.mxu0 0.0
        %382 = vmatpush2.msra.mxu0 0.0
        %383 = vmatprep.mubr.f32.mxu0 0.0
        %384 = vmatmul.mubr.f32.gmra.mxu0 %v317
        %v385 = vpop.f32.mrf.mxu0
        %v386 = vadd.f32 0.0, %v385
        %v387 = vpop.f32.mrf.mxu0
        %388 = vdwg.mxu0
        %v389 = vld [vmem:[#allocation2] sm:$0xff]
        %v390 = vld [vmem:[#allocation3] sm:$0xff]
        %391 = vxpose.xlu0.b32.start [1/16] %v389, 128
        %392 = vxpose.xlu0.b32.cont [2/16] 0.0, 128
        %393 = vxpose.xlu0.b32.cont [3/16] 0.0, 128
        %394 = vxpose.xlu0.b32.cont [4/16] 0.0, 128
        %395 = vxpose.xlu0.b32.cont [5/16] 0.0, 128
        %396 = vxpose.xlu0.b32.cont [6/16] 0.0, 128
        %397 = vxpose.xlu0.b32.cont [7/16] 0.0, 128
        %398 = vxpose.xlu0.b32.cont [8/16] 0.0, 128
        %399 = vxpose.xlu0.b32.cont [9/16] 0.0, 128
        %400 = vxpose.xlu0.b32.cont [10/16] 0.0, 128
        %401 = vxpose.xlu0.b32.cont [11/16] 0.0, 128
        %402 = vxpose.xlu0.b32.cont [12/16] 0.0, 128
        %403 = vxpose.xlu0.b32.cont [13/16] 0.0, 128
        %404 = vxpose.xlu0.b32.cont [14/16] 0.0, 128
        %405 = vxpose.xlu0.b32.cont [15/16] 0.0, 128
        %406 = vxpose.xlu0.b32.end [16/16] 0.0, 128
        %v407 = vpop.trf.xlu0
        %v408 = vpop.trf.xlu0
        %v409 = vpop.trf.xlu0
        %v410 = vpop.trf.xlu0
        %v411 = vpop.trf.xlu0
        %v412 = vpop.trf.xlu0
        %v413 = vpop.trf.xlu0
        %v414 = vpop.trf.xlu0
        %v415 = vpop.trf.xlu0
        %v416 = vpop.trf.xlu0
        %v417 = vpop.trf.xlu0
        %v418 = vpop.trf.xlu0
        %v419 = vpop.trf.xlu0
        %v420 = vpop.trf.xlu0
        %v421 = vpop.trf.xlu0
        %v422 = vpop.trf.xlu0
        %v424 = vsel %vm315, %v407, 0
        %v427 = vsel %vm315, %v408, 0
        %v430 = vsel %vm315, %v409, 0
        %v433 = vsel %vm315, %v410, 0
        %v436 = vsel %vm315, %v411, 0
        %v439 = vsel %vm315, %v412, 0
        %v442 = vsel %vm315, %v413, 0
        %v445 = vsel %vm315, %v414, 0
        %v448 = vsel %vm315, %v415, 0
        %v451 = vsel %vm315, %v416, 0
        %v454 = vsel %vm315, %v417, 0
        %v457 = vsel %vm315, %v418, 0
        %v460 = vsel %vm315, %v419, 0
        %v463 = vsel %vm315, %v420, 0
        %v466 = vsel %vm315, %v421, 0
        %v469 = vsel %vm315, %v422, 0
        %471 = vmatprep.subr.mxu0 0.0
        %472 = vmatpush1.msra.mxu0 0.0
        %473 = vmatprep.subr.mxu0 0.0
        %474 = vmatpush1.msra.mxu0 0.0
        %475 = vmatprep.subr.mxu0 0.0
        %476 = vmatpush1.msra.mxu0 0.0
        %477 = vmatprep.subr.mxu0 0.0
        %478 = vmatpush1.msra.mxu0 0.0
        %479 = vmatprep.subr.mxu0 0.0
        %480 = vmatpush1.msra.mxu0 0.0
        %481 = vmatprep.subr.mxu0 0.0
        %482 = vmatpush1.msra.mxu0 0.0
        %483 = vmatprep.subr.mxu0 0.0
        %484 = vmatpush1.msra.mxu0 0.0
        %485 = vmatprep.subr.mxu0 0.0
        %486 = vmatpush1.msra.mxu0 0.0
        %487 = vmatprep.subr.mxu0 0.0
        %488 = vmatpush1.msra.mxu0 0.0
        %489 = vmatprep.subr.mxu0 0.0
        %490 = vmatpush1.msra.mxu0 0.0
        %491 = vmatprep.subr.mxu0 0.0
        %492 = vmatpush1.msra.mxu0 0.0
        %493 = vmatprep.subr.mxu0 0.0
        %494 = vmatpush1.msra.mxu0 0.0
        %495 = vmatprep.subr.mxu0 0.0
        %496 = vmatpush1.msra.mxu0 0.0
        %497 = vmatprep.subr.mxu0 0.0
        %498 = vmatpush1.msra.mxu0 0.0
        %499 = vmatprep.subr.mxu0 0.0
        %500 = vmatpush1.msra.mxu0 0.0
        %501 = vmatprep.subr.mxu0 0.0
        %502 = vmatpush1.msra.mxu0 %v386
        %503 = vmatprep.subr.mxu0 0.0
        %504 = vmatpush2.msra.mxu0 0.0
        %505 = vmatprep.subr.mxu0 0.0
        %506 = vmatpush2.msra.mxu0 0.0
        %507 = vmatprep.subr.mxu0 0.0
        %508 = vmatpush2.msra.mxu0 0.0
        %509 = vmatprep.subr.mxu0 0.0
        %510 = vmatpush2.msra.mxu0 0.0
        %511 = vmatprep.subr.mxu0 0.0
        %512 = vmatpush2.msra.mxu0 0.0
        %513 = vmatprep.subr.mxu0 0.0
        %514 = vmatpush2.msra.mxu0 0.0
        %515 = vmatprep.subr.mxu0 0.0
        %516 = vmatpush2.msra.mxu0 0.0
        %517 = vmatprep.subr.mxu0 0.0
        %518 = vmatpush2.msra.mxu0 0.0
        %519 = vmatprep.subr.mxu0 0.0
        %520 = vmatpush2.msra.mxu0 0.0
        %521 = vmatprep.subr.mxu0 0.0
        %522 = vmatpush2.msra.mxu0 0.0
        %523 = vmatprep.subr.mxu0 0.0
        %524 = vmatpush2.msra.mxu0 0.0
        %525 = vmatprep.subr.mxu0 0.0
        %526 = vmatpush2.msra.mxu0 0.0
        %527 = vmatprep.subr.mxu0 0.0
        %528 = vmatpush2.msra.mxu0 0.0
        %529 = vmatprep.subr.mxu0 0.0
        %530 = vmatpush2.msra.mxu0 0.0
        %531 = vmatprep.subr.mxu0 0.0
        %532 = vmatpush2.msra.mxu0 0.0
        %533 = vmatprep.subr.mxu0 0.0
        %534 = vmatpush2.msra.mxu0 0.0
        %535 = vmatprep.mubr.f32.mxu0 0.0
        %536 = vmatmul.mubr.f32.gmra.mxu0 %v424
        %v537 = vpop.f32.mrf.mxu0
        %v538 = vadd.f32 0.0, %v537
        %v539 = vpop.f32.mrf.mxu0
        %540 = vmatprep.mubr.f32.mxu0 0.0
        %541 = vmatmul.mubr.f32.gmra.mxu0 %v427
        %v542 = vpop.f32.mrf.mxu0
        %v543 = vadd.f32 0.0, %v542
        %v544 = vpop.f32.mrf.mxu0
        %545 = vmatprep.mubr.f32.mxu0 0.0
        %546 = vmatmul.mubr.f32.gmra.mxu0 %v430
        %v547 = vpop.f32.mrf.mxu0
        %v548 = vadd.f32 0.0, %v547
        %v549 = vpop.f32.mrf.mxu0
        %550 = vmatprep.mubr.f32.mxu0 0.0
        %551 = vmatmul.mubr.f32.gmra.mxu0 %v433
        %v552 = vpop.f32.mrf.mxu0
        %v553 = vadd.f32 0.0, %v552
        %v554 = vpop.f32.mrf.mxu0
        %555 = vmatprep.mubr.f32.mxu0 0.0
        %556 = vmatmul.mubr.f32.gmra.mxu0 %v436
        %v557 = vpop.f32.mrf.mxu0
        %v558 = vadd.f32 0.0, %v557
        %v559 = vpop.f32.mrf.mxu0
        %560 = vmatprep.mubr.f32.mxu0 0.0
        %561 = vmatmul.mubr.f32.gmra.mxu0 %v439
        %v562 = vpop.f32.mrf.mxu0
        %v563 = vadd.f32 0.0, %v562
        %v564 = vpop.f32.mrf.mxu0
        %565 = vmatprep.mubr.f32.mxu0 0.0
        %566 = vmatmul.mubr.f32.gmra.mxu0 %v442
        %v567 = vpop.f32.mrf.mxu0
        %v568 = vadd.f32 0.0, %v567
        %v569 = vpop.f32.mrf.mxu0
        %570 = vmatprep.mubr.f32.mxu0 0.0
        %571 = vmatmul.mubr.f32.gmra.mxu0 %v445
        %v572 = vpop.f32.mrf.mxu0
        %v573 = vadd.f32 0.0, %v572
        %v574 = vpop.f32.mrf.mxu0
        %575 = vmatprep.mubr.f32.mxu0 0.0
        %576 = vmatmul.mubr.f32.gmra.mxu0 %v448
        %v577 = vpop.f32.mrf.mxu0
        %v578 = vadd.f32 0.0, %v577
        %v579 = vpop.f32.mrf.mxu0
        %580 = vmatprep.mubr.f32.mxu0 0.0
        %581 = vmatmul.mubr.f32.gmra.mxu0 %v451
        %v582 = vpop.f32.mrf.mxu0
        %v583 = vadd.f32 0.0, %v582
        %v584 = vpop.f32.mrf.mxu0
        %585 = vmatprep.mubr.f32.mxu0 0.0
        %586 = vmatmul.mubr.f32.gmra.mxu0 %v454
        %v587 = vpop.f32.mrf.mxu0
        %v588 = vadd.f32 0.0, %v587
        %v589 = vpop.f32.mrf.mxu0
        %590 = vmatprep.mubr.f32.mxu0 0.0
        %591 = vmatmul.mubr.f32.gmra.mxu0 %v457
        %v592 = vpop.f32.mrf.mxu0
        %v593 = vadd.f32 0.0, %v592
        %v594 = vpop.f32.mrf.mxu0
        %595 = vmatprep.mubr.f32.mxu0 0.0
        %596 = vmatmul.mubr.f32.gmra.mxu0 %v460
        %v597 = vpop.f32.mrf.mxu0
        %v598 = vadd.f32 0.0, %v597
        %v599 = vpop.f32.mrf.mxu0
        %600 = vmatprep.mubr.f32.mxu0 0.0
        %601 = vmatmul.mubr.f32.gmra.mxu0 %v463
        %v602 = vpop.f32.mrf.mxu0
        %v603 = vadd.f32 0.0, %v602
        %v604 = vpop.f32.mrf.mxu0
        %605 = vmatprep.mubr.f32.mxu0 0.0
        %606 = vmatmul.mubr.f32.gmra.mxu0 %v466
        %v607 = vpop.f32.mrf.mxu0
        %v608 = vadd.f32 0.0, %v607
        %v609 = vpop.f32.mrf.mxu0
        %610 = vmatprep.mubr.f32.mxu0 0.0
        %611 = vmatmul.mubr.f32.gmra.mxu0 %v469
        %v612 = vpop.f32.mrf.mxu0
        %v613 = vadd.f32 0.0, %v612
        %v614 = vpop.f32.mrf.mxu0
        %615 = vdwg.mxu0
        %v616 = vmax.f32 %v538, %v558
        %v617 = vmax.f32 %v543, %v563
        %v618 = vmax.f32 %v548, %v568
        %v619 = vmax.f32 %v553, %v573
        %v620 = vmax.f32 %v616, %v578
        %v621 = vmax.f32 %v617, %v583
        %v622 = vmax.f32 %v618, %v588
        %v623 = vmax.f32 %v619, %v593
        %v624 = vmax.f32 %v620, %v598
        %v625 = vmax.f32 %v621, %v603
        %v626 = vmax.f32 %v622, %v608
        %v627 = vmax.f32 %v623, %v613
        %v628 = vmax.f32 %v624, %v625
        %v629 = vmax.f32 %v626, %v627
        %v630 = vmax.f32 %v628, %v629
        %v631 = vrot.slane %v630, 4
        %v632 = vmax.f32 %v630, %v631
        %v633 = vrot.slane %v632, 2
        %v634 = vmax.f32 %v632, %v633
        %v635 = vrot.slane %v634, 1
        %v636 = vmax.f32 %v634, %v635
        %v637 = vsub.f32 -inf, %v636
        %v638 = vmul.f32 %v637, 1.442695
        %v639 = vpow.pop %v638
        %v640 = vsub.f32 %v538, %v636
        %v641 = vsub.f32 %v543, %v636
        %v642 = vsub.f32 %v548, %v636
        %v643 = vsub.f32 %v553, %v636
        %v644 = vsub.f32 %v558, %v636
        %v645 = vsub.f32 %v563, %v636
        %v646 = vsub.f32 %v568, %v636
        %v647 = vsub.f32 %v573, %v636
        %v648 = vsub.f32 %v578, %v636
        %v649 = vsub.f32 %v583, %v636
        %v650 = vsub.f32 %v588, %v636
        %v651 = vsub.f32 %v593, %v636
        %v652 = vsub.f32 %v598, %v636
        %v653 = vsub.f32 %v603, %v636
        %v654 = vsub.f32 %v608, %v636
        %v655 = vsub.f32 %v613, %v636
        %v656 = vmul.f32 %v640, 1.442695
        %v657 = vpow.pop %v656
        %v658 = vmul.f32 %v641, 1.442695
        %v659 = vpow.pop %v658
        %v660 = vmul.f32 %v642, 1.442695
        %v661 = vpow.pop %v660
        %v662 = vmul.f32 %v643, 1.442695
        %v663 = vpow.pop %v662
        %v664 = vmul.f32 %v644, 1.442695
        %v665 = vpow.pop %v664
        %v666 = vmul.f32 %v645, 1.442695
        %v667 = vpow.pop %v666
        %v668 = vmul.f32 %v646, 1.442695
        %v669 = vpow.pop %v668
        %v670 = vmul.f32 %v647, 1.442695
        %v671 = vpow.pop %v670
        %v672 = vmul.f32 %v648, 1.442695
        %v673 = vpow.pop %v672
        %v674 = vmul.f32 %v649, 1.442695
        %v675 = vpow.pop %v674
        %v676 = vmul.f32 %v650, 1.442695
        %v677 = vpow.pop %v676
        %v678 = vmul.f32 %v651, 1.442695
        %v679 = vpow.pop %v678
        %v680 = vmul.f32 %v652, 1.442695
        %v681 = vpow.pop %v680
        %v682 = vmul.f32 %v653, 1.442695
        %v683 = vpow.pop %v682
        %v684 = vmul.f32 %v654, 1.442695
        %v685 = vpow.pop %v684
        %v686 = vmul.f32 %v655, 1.442695
        %v687 = vpow.pop %v686
        %v688 = vadd.f32 %v657, %v659
        %v689 = vadd.f32 %v688, %v661
        %v690 = vadd.f32 %v689, %v663
        %v691 = vadd.f32 %v690, %v665
        %v692 = vadd.f32 %v691, %v667
        %v693 = vadd.f32 %v692, %v669
        %v694 = vadd.f32 %v693, %v671
        %v695 = vadd.f32 %v694, %v673
        %v696 = vadd.f32 %v695, %v675
        %v697 = vadd.f32 %v696, %v677
        %v698 = vadd.f32 %v697, %v679
        %v699 = vadd.f32 %v698, %v681
        %v700 = vadd.f32 %v699, %v683
        %v701 = vadd.f32 %v700, %v685
        %v702 = vadd.f32 %v701, %v687
        %v703 = vrot.slane %v702, 4
        %v704 = vadd.f32 %v702, %v703
        %v705 = vrot.slane %v704, 2
        %v706 = vadd.f32 %v704, %v705
        %v707 = vrot.slane %v706, 1
        %v708 = vadd.f32 %v706, %v707
        %v709 = vmul.f32 %v639, 0.0
        %v710 = vadd.f32 %v709, %v708
        %711 = vmatprep.subr.mxu0 0.0
        %712 = vmatpush1.msra.mxu0 %v687
        %713 = vmatprep.subr.mxu0 0.0
        %714 = vmatpush1.msra.mxu0 %v685
        %715 = vmatprep.subr.mxu0 0.0
        %716 = vmatpush1.msra.mxu0 %v683
        %717 = vmatprep.subr.mxu0 0.0
        %718 = vmatpush1.msra.mxu0 %v681
        %719 = vmatprep.subr.mxu0 0.0
        %720 = vmatpush1.msra.mxu0 %v679
        %721 = vmatprep.subr.mxu0 0.0
        %722 = vmatpush1.msra.mxu0 %v677
        %723 = vmatprep.subr.mxu0 0.0
        %724 = vmatpush1.msra.mxu0 %v675
        %725 = vmatprep.subr.mxu0 0.0
        %726 = vmatpush1.msra.mxu0 %v673
        %727 = vmatprep.subr.mxu0 0.0
        %728 = vmatpush1.msra.mxu0 %v671
        %729 = vmatprep.subr.mxu0 0.0
        %730 = vmatpush1.msra.mxu0 %v669
        %731 = vmatprep.subr.mxu0 0.0
        %732 = vmatpush1.msra.mxu0 %v667
        %733 = vmatprep.subr.mxu0 0.0
        %734 = vmatpush1.msra.mxu0 %v665
        %735 = vmatprep.subr.mxu0 0.0
        %736 = vmatpush1.msra.mxu0 %v663
        %737 = vmatprep.subr.mxu0 0.0
        %738 = vmatpush1.msra.mxu0 %v661
        %739 = vmatprep.subr.mxu0 0.0
        %740 = vmatpush1.msra.mxu0 %v659
        %741 = vmatprep.subr.mxu0 0.0
        %742 = vmatpush1.msra.mxu0 %v657
        %743 = vmatprep.subr.mxu0 0.0
        %744 = vmatpush2.msra.mxu0 0.0
        %745 = vmatprep.subr.mxu0 0.0
        %746 = vmatpush2.msra.mxu0 0.0
        %747 = vmatprep.subr.mxu0 0.0
        %748 = vmatpush2.msra.mxu0 0.0
        %749 = vmatprep.subr.mxu0 0.0
        %750 = vmatpush2.msra.mxu0 0.0
        %751 = vmatprep.subr.mxu0 0.0
        %752 = vmatpush2.msra.mxu0 0.0
        %753 = vmatprep.subr.mxu0 0.0
        %754 = vmatpush2.msra.mxu0 0.0
        %755 = vmatprep.subr.mxu0 0.0
        %756 = vmatpush2.msra.mxu0 0.0
        %757 = vmatprep.subr.mxu0 0.0
        %758 = vmatpush2.msra.mxu0 0.0
        %759 = vmatprep.subr.mxu0 0.0
        %760 = vmatpush2.msra.mxu0 0.0
        %761 = vmatprep.subr.mxu0 0.0
        %762 = vmatpush2.msra.mxu0 0.0
        %763 = vmatprep.subr.mxu0 0.0
        %764 = vmatpush2.msra.mxu0 0.0
        %765 = vmatprep.subr.mxu0 0.0
        %766 = vmatpush2.msra.mxu0 0.0
        %767 = vmatprep.subr.mxu0 0.0
        %768 = vmatpush2.msra.mxu0 0.0
        %769 = vmatprep.subr.mxu0 0.0
        %770 = vmatpush2.msra.mxu0 0.0
        %771 = vmatprep.subr.mxu0 0.0
        %772 = vmatpush2.msra.mxu0 0.0
        %773 = vmatprep.subr.mxu0 0.0
        %774 = vmatpush2.msra.mxu0 0.0
        %775 = vmatprep.mubr.f32.mxu0 0.0
        %776 = vmatmul.mubr.f32.gmra.mxu0 %v390
        %v777 = vpop.f32.mrf.mxu0
        %v778 = vadd.f32 0.0, %v777
        %v779 = vpop.f32.mrf.mxu0
        %780 = vdwg.mxu0
        %v781 = vadd.f32 %v709, %v778
        %v782 = vrcp.pop %v710
        %v783 = vmul.f32 %v781, %v782
        %784 = vst [vmem:[%s148] sm:$0xff] %v783
        %s785 = sand.u32 %s85, 1
        %s786 = scalar_lea.sflag [#allocation5], %s785
        %s787 = sand.u32 %s85, 1
        %s788 = smul.addr %s787, 8
        %s789 = scalar_lea.vmem [#allocation4], %s788
        // Predicated region
        $region33: #{tpu_custom_call.1} parent=27 // pred_check
          %p790 = pneg %p95
        $region34: #{tpu_custom_call.1} parent=27 // pred_check_branch
          %792 = sbr.rel (%p790) target = $region36
        $region35: #{tpu_custom_call.1} parent=27 // pred_region
          %s794 = ssub.s32 128, 128
          %795 = vsyncadd %s786, %s794
          %s796 = sadd.s32 %s21, %s20
          %s797 = smul.addr %s796, 128
          %s798 = scalar_lea.hbm %s2, %s797
          %s800 = sshll.u32 %s789, 4
          %s801 = int_to_ptr.vmem [resolvable:$true] %s800
          %803 = dma.vmem_to_hbm [thread:$0]  %s801, 128, %s798, %s786
        $region36: #{tpu_custom_call.1} parent=27 // pred_fallthru
          _
      $region28: #{tpu_custom_call.1} parent=5 // pred_fallthru
        _
      %p804 = scmp.le.s32.totalorder 2, %s11
      // Predicated region
      $region37: #{tpu_custom_call.1} parent=5 // pred_check
        %p805 = pneg %p804
      $region38: #{tpu_custom_call.1} parent=5 // pred_check_branch
        %807 = sbr.rel (%p805) target = $region40
      $region39: #{tpu_custom_call.1} parent=5 // pred_region
        %s808 = ssub.s32 %s11, 2
        // Predicated region
        $region41: #{tpu_custom_call.1} parent=39 // pred_check
          %p809 = pneg %p101
        $region42: #{tpu_custom_call.1} parent=39 // pred_check_branch
          %811 = sbr.rel (%p809) target = $region44
        $region43: #{tpu_custom_call.1} parent=39 // pred_region
          %s812 = sand.u32 %s86, 1
          %s813 = scalar_lea.sflag [#allocation5], %s812
          %s814 = sand.u32 %s86, 1
          %s815 = smul.addr %s814, 8
          %s816 = scalar_lea.vmem [#allocation4], %s815
          %817 = dma.done %s813, 128
        $region44: #{tpu_custom_call.1} parent=39 // pred_fallthru
          _
      $region40: #{tpu_custom_call.1} parent=5 // pred_fallthru
        _
    $region6: #{tpu_custom_call.1} parent=1 // loop_footer
      %s15 = sadd.s32 1, %s11
    $region7: #{tpu_custom_call.1} parent=1 // loop_footer_branch
      %10 = sbr.rel target = $region3
    $region8: #{tpu_custom_call.1} parent=1 // loop_exit
      _
    %818 = vsyncpa [#allocation5], 1
    %s819 = scalar_lea.sflag [#allocation5], 1
    %820 = vsyncpa %s819, 1

</llo_original>
